<compile_context>
chip_gen: v7x
topology: tpu7x:2x2x1
jax: 0.10.0
libtpu: 0.0.40
codegen_flags: <defaults>
</compile_context>

<pallas_src>
import functools

import jax
import jax.numpy as jnp
from jax.experimental import pallas as pl
from jax.experimental.pallas import tpu as pltpu

EPS = 1e-5


# --------------------------------------------------------------------------- #
# Pallas kernel
# --------------------------------------------------------------------------- #
def predictor_kernel(a_ref, x_ref, w1_ref, w2_ref, wl_ref, vec_ref, out_ref,
                     *, hidden, c_out):
    two_h = 2 * hidden
    two_c = 2 * c_out

    a = a_ref[...]          # [N, N]    normalized adjacency Â
    x = x_ref[...]          # [N, C_in]

    # Shared aggregation, computed once for both branches:  Â x
    ax = jnp.dot(a, x, preferred_element_type=jnp.float32)                 # [N, C_in]

    # GCN layer 1, encoder|decoder lane-fused: tanh((Âx) [W1e|W1d] + [b1e|b1d])
    h1 = jnp.tanh(jnp.dot(ax, w1_ref[...], preferred_element_type=jnp.float32)
                  + vec_ref[0:1, 0:two_h])                                 # [N, 2H]

    # GCN layer 2 (block-diagonal W2): tanh(Â (h1 W2bd) + [b2e|b2d])
    z2 = jnp.dot(h1, w2_ref[...], preferred_element_type=jnp.float32)      # [N, 2H]
    h2 = jnp.tanh(jnp.dot(a, z2, preferred_element_type=jnp.float32)
                  + vec_ref[1:2, 0:two_h])                                 # [N, 2H]

    # JumpingKnowledge 'max' + per-branch final Linear (block-diagonal W_lin)
    hjk = jnp.maximum(h1, h2)
    emb = (jnp.dot(hjk, wl_ref[...], preferred_element_type=jnp.float32)
           + vec_ref[2:3, 0:two_c])                                        # [N, 2C]

    # torch_geometric LayerNorm(mode='node'): per-node layer norm, per branch.
    def node_ln(e, w, b):
        mu = jnp.mean(e, axis=-1, keepdims=True)
        var = jnp.mean(jnp.square(e - mu), axis=-1, keepdims=True)
        return (e - mu) * jax.lax.rsqrt(var + EPS) * w + b

    f_emb = node_ln(emb[:, 0:c_out],
                    vec_ref[3:4, 0:c_out], vec_ref[4:5, 0:c_out])
    b_emb = node_ln(emb[:, c_out:two_c],
                    vec_ref[3:4, c_out:two_c], vec_ref[4:5, c_out:two_c])

    # reduce == 'mean'
    node = (f_emb + b_emb) * 0.5

    # BatchNorm1d (training mode -> batch statistics over the node axis), with the
    # final Linear(out_channels, 1, bias=False) folded into per-channel scale/bias:
    #   out[n] = sum_c ((node-mu)*rsqrt(var+eps)) * (bn_w*fw) + sum_c (bn_b*fw)
    mu = jnp.mean(node, axis=0, keepdims=True)
    var = jnp.mean(jnp.square(node - mu), axis=0, keepdims=True)
    xn = (node - mu) * jax.lax.rsqrt(var + EPS)
    scale = vec_ref[5:6, 0:c_out]        # bn_weight * w_final
    bias = vec_ref[6:7, 0:c_out]         # bn_bias   * w_final
    out_ref[...] = jnp.sum(xn * scale + bias, axis=-1, keepdims=True)


# --------------------------------------------------------------------------- #
# Wrapper
# --------------------------------------------------------------------------- #
def _block_diag(a, b):
    r1, c1 = a.shape
    r2, c2 = b.shape
    top = jnp.concatenate([a, jnp.zeros((r1, c2), a.dtype)], axis=1)
    bot = jnp.concatenate([jnp.zeros((r2, c1), b.dtype), b], axis=1)
    return jnp.concatenate([top, bot], axis=0)


def _pad_row(v, width):
    v = jnp.reshape(v, (-1,))
    return jnp.pad(v, (0, width - v.shape[0]))


@jax.jit
def parameter_property_predictor(a_hat, x, params):
    """params: dict of kernel parameters (see build_params)."""
    n, _ = x.shape
    hidden = params["ew1"].shape[1]
    c_out = params["ewl"].shape[1]
    width = max(2 * hidden, 2 * c_out)

    # ---- pack parameters into a few slabs (plain-JAX glue, tiny) ----
    w1c = jnp.concatenate([params["ew1"], params["dw1"]], axis=1)        # (C_in, 2H)
    w2bd = _block_diag(params["ew2"], params["dw2"])                     # (2H, 2H)
    wlbd = _block_diag(params["ewl"], params["dwl"])                     # (2H, 2C)

    fw = params["fw"][:, 0]
    vecs = jnp.stack([
        _pad_row(jnp.concatenate([params["eb1"], params["db1"]], axis=1), width),
        _pad_row(jnp.concatenate([params["eb2"], params["db2"]], axis=1), width),
        _pad_row(jnp.concatenate([params["ebl"], params["dbl"]], axis=1), width),
        _pad_row(jnp.concatenate([params["elnw"], params["dlnw"]], axis=1), width),
        _pad_row(jnp.concatenate([params["elnb"], params["dlnb"]], axis=1), width),
        _pad_row(params["bnw"][0] * fw, width),
        _pad_row(params["bnb"][0] * fw, width),
    ], axis=0)                                                           # (7, width)

    vmem = pl.BlockSpec(memory_space=pltpu.MemorySpace.VMEM)
    out = pl.pallas_call(
        functools.partial(predictor_kernel, hidden=hidden, c_out=c_out),
        out_shape=jax.ShapeDtypeStruct((n, 1), jnp.float32),
        in_specs=[vmem] * 6,
        out_specs=vmem,
    )(a_hat, x, w1c, w2bd, wlbd, vecs)
    return out[:, 0]  # .squeeze(1)


# --------------------------------------------------------------------------- #
# Parameter / input construction (deterministic, synthetic)
# --------------------------------------------------------------------------- #
def _lin_init(key, shape, fan_in):
    bound = 1.0 / (fan_in ** 0.5)
    return jax.random.uniform(key, shape, jnp.float32, -bound, bound)


def build_params(key, c_in, hidden, c_out):
    ks = jax.random.split(key, 12)
    p = {}
    # encoder GCN (weights stored pre-transposed: x @ W)
    p["ew1"] = _lin_init(ks[0], (c_in, hidden), c_in)
    p["eb1"] = jnp.zeros((1, hidden), jnp.float32)
    p["ew2"] = _lin_init(ks[1], (hidden, hidden), hidden)
    p["eb2"] = jnp.zeros((1, hidden), jnp.float32)
    p["ewl"] = _lin_init(ks[2], (hidden, c_out), hidden)
    p["ebl"] = _lin_init(ks[3], (1, c_out), hidden)
    p["elnw"] = jnp.ones((1, c_out), jnp.float32)
    p["elnb"] = jnp.zeros((1, c_out), jnp.float32)
    # decoder GCN
    p["dw1"] = _lin_init(ks[4], (c_in, hidden), c_in)
    p["db1"] = jnp.zeros((1, hidden), jnp.float32)
    p["dw2"] = _lin_init(ks[5], (hidden, hidden), hidden)
    p["db2"] = jnp.zeros((1, hidden), jnp.float32)
    p["dwl"] = _lin_init(ks[6], (hidden, c_out), hidden)
    p["dbl"] = _lin_init(ks[7], (1, c_out), hidden)
    p["dlnw"] = jnp.ones((1, c_out), jnp.float32)
    p["dlnb"] = jnp.zeros((1, c_out), jnp.float32)
    # BatchNorm1d affine (default init) + final linear
    p["bnw"] = jnp.ones((1, c_out), jnp.float32)
    p["bnb"] = jnp.zeros((1, c_out), jnp.float32)
    p["fw"] = _lin_init(ks[8], (c_out, 1), c_out)
    return p


def build_normalized_adjacency(edge_index, edge_weight, num_nodes):
    """gcn_norm with add_self_loops=False, symmetric D^{-1/2} A D^{-1/2}."""
    src, dst = edge_index[0], edge_index[1]
    a = jnp.zeros((num_nodes, num_nodes), jnp.float32).at[dst, src].add(edge_weight)
    deg = a.sum(axis=1)  # in-degree (scatter of edge_weight over targets)
    dinv = jnp.where(deg > 0, jax.lax.rsqrt(deg), 0.0)
    return dinv[:, None] * a * dinv[None, :]


# --------------------------------------------------------------------------- #
# Pure-JAX reference (for a sanity check only)
# --------------------------------------------------------------------------- #
def reference(a_hat, x, p):
    def branch(w1, b1, w2, b2, wl, bl, lnw, lnb):
        h1 = jnp.tanh(a_hat @ (x @ w1) + b1)
        h2 = jnp.tanh(a_hat @ (h1 @ w2) + b2)
        emb = jnp.maximum(h1, h2) @ wl + bl
        mu = emb.mean(-1, keepdims=True)
        var = ((emb - mu) ** 2).mean(-1, keepdims=True)
        return (emb - mu) / jnp.sqrt(var + EPS) * lnw + lnb

    f = branch(p["ew1"], p["eb1"], p["ew2"], p["eb2"],
               p["ewl"], p["ebl"], p["elnw"], p["elnb"])
    b = branch(p["dw1"], p["db1"], p["dw2"], p["db2"],
               p["dwl"], p["dbl"], p["dlnw"], p["dlnb"])
    node = (f + b) * 0.5
    mu = node.mean(0, keepdims=True)
    var = ((node - mu) ** 2).mean(0, keepdims=True)
    node = (node - mu) / jnp.sqrt(var + EPS) * p["bnw"] + p["bnb"]
    return (node @ p["fw"])[:, 0]


# --------------------------------------------------------------------------- #
if __name__ == "__main__":
    NUM_NODES, IN_CH, HIDDEN, OUT_CH, NUM_EDGES = 64, 16, 32, 32, 256

    key = jax.random.PRNGKey(0)
    k_x, k_src, k_dst, k_w, k_params = jax.random.split(key, 5)

    x = jax.random.normal(k_x, (NUM_NODES, IN_CH), jnp.float32)
    edge_index = jnp.stack([
        jax.random.randint(k_src, (NUM_EDGES,), 0, NUM_NODES),
        jax.random.randint(k_dst, (NUM_EDGES,), 0, NUM_NODES),
    ])
    edge_weight = jax.random.uniform(k_w, (NUM_EDGES,), jnp.float32, 0.5, 1.5)

    params = build_params(k_params, IN_CH, HIDDEN, OUT_CH)
    a_hat = build_normalized_adjacency(edge_index, edge_weight, NUM_NODES)

    out = parameter_property_predictor(a_hat, x, params)
    out = jax.block_until_ready(out)

    ref = reference(a_hat, x, params)
    assert out.shape == (NUM_NODES,)
    assert jnp.allclose(out, ref, rtol=1e-2, atol=1e-2), "kernel/reference mismatch"

    # TODO(synk): reduce modes other than the default 'mean' (concat/linking/both/...)
    # and the use_linear_transform=True branch are not exercised by this kernel.
    print("KERNEL_OK")
</pallas_src>

<mosaic_0001>
module attributes {stable_mosaic.version = 11 : i64} {
  func.func @predictor_kernel(%arg0: memref<64x64xf32, #tpu.memory_space<vmem>>, %arg1: memref<64x16xf32, #tpu.memory_space<vmem>>, %arg2: memref<16x64xf32, #tpu.memory_space<vmem>>, %arg3: memref<64x64xf32, #tpu.memory_space<vmem>>, %arg4: memref<64x64xf32, #tpu.memory_space<vmem>>, %arg5: memref<7x64xf32, #tpu.memory_space<vmem>>, %arg6: memref<64x1xf32, #tpu.memory_space<vmem>>) attributes {dimension_semantics = [], scalar_prefetch = 0 : i64, scratch_operands = 0 : i64, tpu.core_type = #tpu.core_type<tc>} {
    %c0 = arith.constant 0 : index
    %c0_0 = arith.constant 0 : index
    %0 = vector.load %arg0[%c0, %c0_0] : memref<64x64xf32, #tpu.memory_space<vmem>>, vector<64x64xf32>
    %c0_1 = arith.constant 0 : index
    %c0_2 = arith.constant 0 : index
    %1 = vector.load %arg1[%c0_1, %c0_2] : memref<64x16xf32, #tpu.memory_space<vmem>>, vector<64x16xf32>
    %cst = arith.constant dense<0.000000e+00> : vector<64x16xf32>
    %2 = tpu.matmul %0, %1, %cst {dimension_numbers = #tpu.dot_dimension_numbers<[1], [0], [0], [1], [0, 0, 1, 1], [], []>} : vector<64x64xf32>, vector<64x16xf32>, vector<64x16xf32> -> vector<64x16xf32>
    %c0_3 = arith.constant 0 : index
    %c0_4 = arith.constant 0 : index
    %3 = vector.load %arg2[%c0_3, %c0_4] : memref<16x64xf32, #tpu.memory_space<vmem>>, vector<16x64xf32>
    %cst_5 = arith.constant dense<0.000000e+00> : vector<64x64xf32>
    %4 = tpu.matmul %2, %3, %cst_5 {dimension_numbers = #tpu.dot_dimension_numbers<[1], [0], [0], [1], [0, 0, 1, 1], [], []>} : vector<64x16xf32>, vector<16x64xf32>, vector<64x64xf32> -> vector<64x64xf32>
    %c0_6 = arith.constant 0 : index
    %c0_7 = arith.constant 0 : index
    %5 = vector.load %arg5[%c0_6, %c0_7] : memref<7x64xf32, #tpu.memory_space<vmem>>, vector<1x64xf32>
    %6 = vector.broadcast %5 : vector<1x64xf32> to vector<64x64xf32>
    %7 = arith.addf %4, %6 : vector<64x64xf32>
    %8 = math.tanh %7 : vector<64x64xf32>
    %c0_8 = arith.constant 0 : index
    %c0_9 = arith.constant 0 : index
    %9 = vector.load %arg3[%c0_8, %c0_9] : memref<64x64xf32, #tpu.memory_space<vmem>>, vector<64x64xf32>
    %cst_10 = arith.constant dense<0.000000e+00> : vector<64x64xf32>
    %10 = tpu.matmul %8, %9, %cst_10 {dimension_numbers = #tpu.dot_dimension_numbers<[1], [0], [0], [1], [0, 0, 1, 1], [], []>} : vector<64x64xf32>, vector<64x64xf32>, vector<64x64xf32> -> vector<64x64xf32>
    %cst_11 = arith.constant dense<0.000000e+00> : vector<64x64xf32>
    %11 = tpu.matmul %0, %10, %cst_11 {dimension_numbers = #tpu.dot_dimension_numbers<[1], [0], [0], [1], [0, 0, 1, 1], [], []>} : vector<64x64xf32>, vector<64x64xf32>, vector<64x64xf32> -> vector<64x64xf32>
    %c1 = arith.constant 1 : index
    %c0_12 = arith.constant 0 : index
    %12 = vector.load %arg5[%c1, %c0_12] : memref<7x64xf32, #tpu.memory_space<vmem>>, vector<1x64xf32>
    %13 = vector.broadcast %12 : vector<1x64xf32> to vector<64x64xf32>
    %14 = arith.addf %11, %13 : vector<64x64xf32>
    %15 = math.tanh %14 : vector<64x64xf32>
    %16 = arith.maximumf %8, %15 : vector<64x64xf32>
    %c0_13 = arith.constant 0 : index
    %c0_14 = arith.constant 0 : index
    %17 = vector.load %arg4[%c0_13, %c0_14] : memref<64x64xf32, #tpu.memory_space<vmem>>, vector<64x64xf32>
    %cst_15 = arith.constant dense<0.000000e+00> : vector<64x64xf32>
    %18 = tpu.matmul %16, %17, %cst_15 {dimension_numbers = #tpu.dot_dimension_numbers<[1], [0], [0], [1], [0, 0, 1, 1], [], []>} : vector<64x64xf32>, vector<64x64xf32>, vector<64x64xf32> -> vector<64x64xf32>
    %c2 = arith.constant 2 : index
    %c0_16 = arith.constant 0 : index
    %19 = vector.load %arg5[%c2, %c0_16] : memref<7x64xf32, #tpu.memory_space<vmem>>, vector<1x64xf32>
    %20 = vector.broadcast %19 : vector<1x64xf32> to vector<64x64xf32>
    %21 = arith.addf %18, %20 : vector<64x64xf32>
    %22 = vector.extract_strided_slice %21 {offsets = [0, 0], sizes = [64, 32], strides = [1, 1]} : vector<64x64xf32> to vector<64x32xf32>
    %c3 = arith.constant 3 : index
    %c0_17 = arith.constant 0 : index
    %23 = vector.load %arg5[%c3, %c0_17] : memref<7x64xf32, #tpu.memory_space<vmem>>, vector<1x32xf32>
    %c4 = arith.constant 4 : index
    %c0_18 = arith.constant 0 : index
    %24 = vector.load %arg5[%c4, %c0_18] : memref<7x64xf32, #tpu.memory_space<vmem>>, vector<1x32xf32>
    %cst_19 = arith.constant dense<0.000000e+00> : vector<64xf32>
    %25 = vector.multi_reduction <add>, %22, %cst_19 [1] : vector<64x32xf32> to vector<64xf32>
    %26 = vector.shape_cast %25 : vector<64xf32> to vector<64x1xf32>
    %cst_20 = arith.constant 3.200000e+01 : f32
    %27 = vector.broadcast %cst_20 : f32 to vector<64x1xf32>
    %28 = arith.divf %26, %27 : vector<64x1xf32>
    %29 = vector.broadcast %28 : vector<64x1xf32> to vector<64x32xf32>
    %30 = arith.subf %22, %29 : vector<64x32xf32>
    %31 = arith.mulf %30, %30 : vector<64x32xf32>
    %cst_21 = arith.constant dense<0.000000e+00> : vector<64xf32>
    %32 = vector.multi_reduction <add>, %31, %cst_21 [1] : vector<64x32xf32> to vector<64xf32>
    %33 = vector.shape_cast %32 : vector<64xf32> to vector<64x1xf32>
    %cst_22 = arith.constant 3.200000e+01 : f32
    %34 = vector.broadcast %cst_22 : f32 to vector<64x1xf32>
    %35 = arith.divf %33, %34 : vector<64x1xf32>
    %36 = vector.broadcast %28 : vector<64x1xf32> to vector<64x32xf32>
    %37 = arith.subf %22, %36 : vector<64x32xf32>
    %cst_23 = arith.constant 9.99999974E-6 : f32
    %38 = vector.broadcast %cst_23 : f32 to vector<64x1xf32>
    %39 = arith.addf %35, %38 : vector<64x1xf32>
    %40 = math.rsqrt %39 : vector<64x1xf32>
    %41 = vector.broadcast %40 : vector<64x1xf32> to vector<64x32xf32>
    %42 = arith.mulf %37, %41 : vector<64x32xf32>
    %43 = vector.broadcast %23 : vector<1x32xf32> to vector<64x32xf32>
    %44 = arith.mulf %42, %43 : vector<64x32xf32>
    %45 = vector.broadcast %24 : vector<1x32xf32> to vector<64x32xf32>
    %46 = arith.addf %44, %45 : vector<64x32xf32>
    %47 = vector.extract_strided_slice %21 {offsets = [0, 32], sizes = [64, 32], strides = [1, 1]} : vector<64x64xf32> to vector<64x32xf32>
    %c3_24 = arith.constant 3 : index
    %c32 = arith.constant 32 : index
    %48 = vector.load %arg5[%c3_24, %c32] : memref<7x64xf32, #tpu.memory_space<vmem>>, vector<1x32xf32>
    %c4_25 = arith.constant 4 : index
    %c32_26 = arith.constant 32 : index
    %49 = vector.load %arg5[%c4_25, %c32_26] : memref<7x64xf32, #tpu.memory_space<vmem>>, vector<1x32xf32>
    %cst_27 = arith.constant dense<0.000000e+00> : vector<64xf32>
    %50 = vector.multi_reduction <add>, %47, %cst_27 [1] : vector<64x32xf32> to vector<64xf32>
    %51 = vector.shape_cast %50 : vector<64xf32> to vector<64x1xf32>
    %cst_28 = arith.constant 3.200000e+01 : f32
    %52 = vector.broadcast %cst_28 : f32 to vector<64x1xf32>
    %53 = arith.divf %51, %52 : vector<64x1xf32>
    %54 = vector.broadcast %53 : vector<64x1xf32> to vector<64x32xf32>
    %55 = arith.subf %47, %54 : vector<64x32xf32>
    %56 = arith.mulf %55, %55 : vector<64x32xf32>
    %cst_29 = arith.constant dense<0.000000e+00> : vector<64xf32>
    %57 = vector.multi_reduction <add>, %56, %cst_29 [1] : vector<64x32xf32> to vector<64xf32>
    %58 = vector.shape_cast %57 : vector<64xf32> to vector<64x1xf32>
    %cst_30 = arith.constant 3.200000e+01 : f32
    %59 = vector.broadcast %cst_30 : f32 to vector<64x1xf32>
    %60 = arith.divf %58, %59 : vector<64x1xf32>
    %61 = vector.broadcast %53 : vector<64x1xf32> to vector<64x32xf32>
    %62 = arith.subf %47, %61 : vector<64x32xf32>
    %cst_31 = arith.constant 9.99999974E-6 : f32
    %63 = vector.broadcast %cst_31 : f32 to vector<64x1xf32>
    %64 = arith.addf %60, %63 : vector<64x1xf32>
    %65 = math.rsqrt %64 : vector<64x1xf32>
    %66 = vector.broadcast %65 : vector<64x1xf32> to vector<64x32xf32>
    %67 = arith.mulf %62, %66 : vector<64x32xf32>
    %68 = vector.broadcast %48 : vector<1x32xf32> to vector<64x32xf32>
    %69 = arith.mulf %67, %68 : vector<64x32xf32>
    %70 = vector.broadcast %49 : vector<1x32xf32> to vector<64x32xf32>
    %71 = arith.addf %69, %70 : vector<64x32xf32>
    %72 = arith.addf %46, %71 : vector<64x32xf32>
    %cst_32 = arith.constant 5.000000e-01 : f32
    %73 = vector.broadcast %cst_32 : f32 to vector<64x32xf32>
    %74 = arith.mulf %72, %73 : vector<64x32xf32>
    %cst_33 = arith.constant dense<0.000000e+00> : vector<32xf32>
    %75 = vector.multi_reduction <add>, %74, %cst_33 [0] : vector<64x32xf32> to vector<32xf32>
    %76 = vector.shape_cast %75 : vector<32xf32> to vector<1x32xf32>
    %cst_34 = arith.constant 6.400000e+01 : f32
    %77 = vector.broadcast %cst_34 : f32 to vector<1x32xf32>
    %78 = arith.divf %76, %77 : vector<1x32xf32>
    %79 = vector.broadcast %78 : vector<1x32xf32> to vector<64x32xf32>
    %80 = arith.subf %74, %79 : vector<64x32xf32>
    %81 = arith.mulf %80, %80 : vector<64x32xf32>
    %cst_35 = arith.constant dense<0.000000e+00> : vector<32xf32>
    %82 = vector.multi_reduction <add>, %81, %cst_35 [0] : vector<64x32xf32> to vector<32xf32>
    %83 = vector.shape_cast %82 : vector<32xf32> to vector<1x32xf32>
    %cst_36 = arith.constant 6.400000e+01 : f32
    %84 = vector.broadcast %cst_36 : f32 to vector<1x32xf32>
    %85 = arith.divf %83, %84 : vector<1x32xf32>
    %86 = vector.broadcast %78 : vector<1x32xf32> to vector<64x32xf32>
    %87 = arith.subf %74, %86 : vector<64x32xf32>
    %cst_37 = arith.constant 9.99999974E-6 : f32
    %88 = vector.broadcast %cst_37 : f32 to vector<1x32xf32>
    %89 = arith.addf %85, %88 : vector<1x32xf32>
    %90 = math.rsqrt %89 : vector<1x32xf32>
    %91 = vector.broadcast %90 : vector<1x32xf32> to vector<64x32xf32>
    %92 = arith.mulf %87, %91 : vector<64x32xf32>
    %c5 = arith.constant 5 : index
    %c0_38 = arith.constant 0 : index
    %93 = vector.load %arg5[%c5, %c0_38] : memref<7x64xf32, #tpu.memory_space<vmem>>, vector<1x32xf32>
    %c6 = arith.constant 6 : index
    %c0_39 = arith.constant 0 : index
    %94 = vector.load %arg5[%c6, %c0_39] : memref<7x64xf32, #tpu.memory_space<vmem>>, vector<1x32xf32>
    %95 = vector.broadcast %93 : vector<1x32xf32> to vector<64x32xf32>
    %96 = arith.mulf %92, %95 : vector<64x32xf32>
    %97 = vector.broadcast %94 : vector<1x32xf32> to vector<64x32xf32>
    %98 = arith.addf %96, %97 : vector<64x32xf32>
    %cst_40 = arith.constant dense<0.000000e+00> : vector<64xf32>
    %99 = vector.multi_reduction <add>, %98, %cst_40 [1] : vector<64x32xf32> to vector<64xf32>
    %100 = vector.shape_cast %99 : vector<64xf32> to vector<64x1xf32>
    %c0_41 = arith.constant 0 : index
    %c0_42 = arith.constant 0 : index
    %101 = vector.load %arg6[%c0_41, %c0_42] : memref<64x1xf32, #tpu.memory_space<vmem>>, vector<64x1xf32>
    tpu.vector_store %arg6[%c0_41, %c0_42], %100 {strides = array<i32>} : memref<64x1xf32, #tpu.memory_space<vmem>>, vector<64x1xf32>,
    return
  }
}

</mosaic_0001>

<llo_original>
// kernel: parameter_property_predictor.1
$region0: #{parameter_property_predictor.1}
  #allocation0 [shape = 'u32[]', space=smem, size = 0x4, offset = 0x4, fixed_abs, tag = 'smem constant byte address 0x4 - core index']
  #allocation1 [shape = 'u32[144,128]{1,0:T(1,128)}', space=vmem, size = 0x12000, scoped, tag = 'internal scratch']
  %s0 = inlined_call_operand.vmem [shape: f32[64,64], index: 0, kind: input, shape index: {}]
  %s1 = inlined_call_operand.vmem [shape: f32[64,16], index: 1, kind: input, shape index: {}]
  %s2 = inlined_call_operand.vmem [shape: f32[16,64], index: 2, kind: input, shape index: {}]
  %s3 = inlined_call_operand.vmem [shape: f32[64,64], index: 3, kind: input, shape index: {}]
  %s4 = inlined_call_operand.vmem [shape: f32[64,64], index: 4, kind: input, shape index: {}]
  %s5 = inlined_call_operand.vmem [shape: f32[7,64], index: 5, kind: input, shape index: {}]
  %s6 = inlined_call_operand.vmem [shape: f32[64,1], index: 6, kind: output, shape index: {}]
  %s7 = sld [smem:[#allocation0]]
  $region34: #{parameter_property_predictor.1} parent=0
    _
  %s9 = ssub.s32 1, %s7
  %s10 = scalar_select 0, %s9, %s7
  // Predicated region
  $region2: #{parameter_property_predictor.1} parent=0 // pred_check
    _
  $region3: #{parameter_property_predictor.1} parent=0 // pred_check_branch
    %12 = sbr.rel (0) target = $region5
  $region4: #{parameter_property_predictor.1} parent=0 // pred_region
    _
  $region5: #{parameter_property_predictor.1} parent=0 // pred_fallthru
    _
  // Predicated region
  $region6: #{parameter_property_predictor.1} parent=0 // pred_check
    _
  $region7: #{parameter_property_predictor.1} parent=0 // pred_check_branch
    %14 = sbr.rel (0) target = $region9
  $region8: #{parameter_property_predictor.1} parent=0 // pred_region
    _
  $region9: #{parameter_property_predictor.1} parent=0 // pred_fallthru
    _
  // Predicated region
  $region10: #{parameter_property_predictor.1} parent=0 // pred_check
    _
  $region11: #{parameter_property_predictor.1} parent=0 // pred_check_branch
    %16 = sbr.rel (0) target = $region13
  $region12: #{parameter_property_predictor.1} parent=0 // pred_region
    _
  $region13: #{parameter_property_predictor.1} parent=0 // pred_fallthru
    _
  // Predicated region
  $region14: #{parameter_property_predictor.1} parent=0 // pred_check
    _
  $region15: #{parameter_property_predictor.1} parent=0 // pred_check_branch
    %18 = sbr.rel (0) target = $region17
  $region16: #{parameter_property_predictor.1} parent=0 // pred_region
    _
  $region17: #{parameter_property_predictor.1} parent=0 // pred_fallthru
    _
  // Predicated region
  $region18: #{parameter_property_predictor.1} parent=0 // pred_check
    _
  $region19: #{parameter_property_predictor.1} parent=0 // pred_check_branch
    %20 = sbr.rel (0) target = $region21
  $region20: #{parameter_property_predictor.1} parent=0 // pred_region
    _
  $region21: #{parameter_property_predictor.1} parent=0 // pred_fallthru
    _
  // Predicated region
  $region22: #{parameter_property_predictor.1} parent=0 // pred_check
    _
  $region23: #{parameter_property_predictor.1} parent=0 // pred_check_branch
    %22 = sbr.rel (0) target = $region25
  $region24: #{parameter_property_predictor.1} parent=0 // pred_region
    _
  $region25: #{parameter_property_predictor.1} parent=0 // pred_fallthru
    _
  %v23 = vld [vmem:[%s0] sm:$0xff]
  %v24 = vld [vmem:[%s0 + $0x8] sm:$0xff]
  %v25 = vld [vmem:[%s0 + $0x10] sm:$0xff]
  %v26 = vld [vmem:[%s0 + $0x18] sm:$0xff]
  %v27 = vld [vmem:[%s0 + $0x20] sm:$0xff]
  %v28 = vld [vmem:[%s0 + $0x28] sm:$0xff]
  %v29 = vld [vmem:[%s0 + $0x30] sm:$0xff]
  %v30 = vld [vmem:[%s0 + $0x38] sm:$0xff]
  %v31 = vld [vmem:[%s1] sm:$0xff]
  %v32 = vld [vmem:[%s1 + $0x8] sm:$0xff]
  %v33 = vld [vmem:[%s1 + $0x10] sm:$0xff]
  %v34 = vld [vmem:[%s1 + $0x18] sm:$0xff]
  %v35 = vld [vmem:[%s1 + $0x20] sm:$0xff]
  %v36 = vld [vmem:[%s1 + $0x28] sm:$0xff]
  %v37 = vld [vmem:[%s1 + $0x30] sm:$0xff]
  %v38 = vld [vmem:[%s1 + $0x38] sm:$0xff]
  %vm39 = vcmask 523264
  %v41 = vsel %vm39, %v23, 0
  %v44 = vsel %vm39, %v24, 0
  %v47 = vsel %vm39, %v25, 0
  %v50 = vsel %vm39, %v26, 0
  %v53 = vsel %vm39, %v27, 0
  %v56 = vsel %vm39, %v28, 0
  %v59 = vsel %vm39, %v29, 0
  %v62 = vsel %vm39, %v30, 0
  %64 = vmatprep.subr.mxu0 0.0
  %65 = vmatpush1.msra.mxu0 %v31
  %66 = vmatprep.subr.mxu0 0.0
  %67 = vmatpush1.msra.mxu0 %v32
  %68 = vmatprep.subr.mxu0 0.0
  %69 = vmatpush1.msra.mxu0 %v33
  %70 = vmatprep.subr.mxu0 0.0
  %71 = vmatpush1.msra.mxu0 %v34
  %72 = vmatprep.subr.mxu0 0.0
  %73 = vmatpush1.msra.mxu0 %v35
  %74 = vmatprep.subr.mxu0 0.0
  %75 = vmatpush1.msra.mxu0 %v36
  %76 = vmatprep.subr.mxu0 0.0
  %77 = vmatpush1.msra.mxu0 %v37
  %78 = vmatprep.subr.mxu0 0.0
  %79 = vmatpush1.msra.mxu0 %v38
  %80 = vmatprep.subr.mxu0 0.0
  %81 = vmatpush1.msra.mxu0 0.0
  %82 = vmatprep.subr.mxu0 0.0
  %83 = vmatpush1.msra.mxu0 0.0
  %84 = vmatprep.subr.mxu0 0.0
  %85 = vmatpush1.msra.mxu0 0.0
  %86 = vmatprep.subr.mxu0 0.0
  %87 = vmatpush1.msra.mxu0 0.0
  %88 = vmatprep.subr.mxu0 0.0
  %89 = vmatpush1.msra.mxu0 0.0
  %90 = vmatprep.subr.mxu0 0.0
  %91 = vmatpush1.msra.mxu0 0.0
  %92 = vmatprep.subr.mxu0 0.0
  %93 = vmatpush1.msra.mxu0 0.0
  %94 = vmatprep.subr.mxu0 0.0
  %95 = vmatpush1.msra.mxu0 0.0
  %96 = vmatprep.subr.mxu0 0.0
  %97 = vmatpush1.msra.mxu0 0.0
  %98 = vmatprep.subr.mxu0 0.0
  %99 = vmatpush1.msra.mxu0 0.0
  %100 = vmatprep.subr.mxu0 0.0
  %101 = vmatpush1.msra.mxu0 0.0
  %102 = vmatprep.subr.mxu0 0.0
  %103 = vmatpush1.msra.mxu0 0.0
  %104 = vmatprep.subr.mxu0 0.0
  %105 = vmatpush1.msra.mxu0 0.0
  %106 = vmatprep.subr.mxu0 0.0
  %107 = vmatpush1.msra.mxu0 0.0
  %108 = vmatprep.subr.mxu0 0.0
  %109 = vmatpush1.msra.mxu0 0.0
  %110 = vmatprep.subr.mxu0 0.0
  %111 = vmatpush1.msra.mxu0 0.0
  %112 = vmatprep.subr.mxu0 0.0
  %113 = vmatpush1.msra.mxu0 0.0
  %114 = vmatprep.subr.mxu0 0.0
  %115 = vmatpush1.msra.mxu0 0.0
  %116 = vmatprep.subr.mxu0 0.0
  %117 = vmatpush1.msra.mxu0 0.0
  %118 = vmatprep.subr.mxu0 0.0
  %119 = vmatpush1.msra.mxu0 0.0
  %120 = vmatprep.subr.mxu0 0.0
  %121 = vmatpush1.msra.mxu0 0.0
  %122 = vmatprep.subr.mxu0 0.0
  %123 = vmatpush1.msra.mxu0 0.0
  %124 = vmatprep.subr.mxu0 0.0
  %125 = vmatpush1.msra.mxu0 0.0
  %126 = vmatprep.subr.mxu0 0.0
  %127 = vmatpush1.msra.mxu0 0.0
  %128 = vmatprep.mubr.f32.mxu0 0.0
  %129 = vmatmul.mubr.f32.gmra.mrb[0].mxu0 %v41
  %v130 = vpop.f32.mrb[0].mxu0
  %v131 = vadd.f32 0.0, %v130
  %v132 = vpop.f32.mrb[0].mxu0
  %133 = vmatprep.mubr.f32.mxu0 0.0
  %134 = vmatmul.mubr.f32.gmra.mrb[0].mxu0 %v44
  %v135 = vpop.f32.mrb[0].mxu0
  %v136 = vadd.f32 0.0, %v135
  %v137 = vpop.f32.mrb[0].mxu0
  %138 = vmatprep.mubr.f32.mxu0 0.0
  %139 = vmatmul.mubr.f32.gmra.mrb[0].mxu0 %v47
  %v140 = vpop.f32.mrb[0].mxu0
  %v141 = vadd.f32 0.0, %v140
  %v142 = vpop.f32.mrb[0].mxu0
  %143 = vmatprep.mubr.f32.mxu0 0.0
  %144 = vmatmul.mubr.f32.gmra.mrb[0].mxu0 %v50
  %v145 = vpop.f32.mrb[0].mxu0
  %v146 = vadd.f32 0.0, %v145
  %v147 = vpop.f32.mrb[0].mxu0
  %148 = vmatprep.mubr.f32.mxu0 0.0
  %149 = vmatmul.mubr.f32.gmra.mrb[0].mxu0 %v53
  %v150 = vpop.f32.mrb[0].mxu0
  %v151 = vadd.f32 0.0, %v150
  %v152 = vpop.f32.mrb[0].mxu0
  %153 = vmatprep.mubr.f32.mxu0 0.0
  %154 = vmatmul.mubr.f32.gmra.mrb[0].mxu0 %v56
  %v155 = vpop.f32.mrb[0].mxu0
  %v156 = vadd.f32 0.0, %v155
  %v157 = vpop.f32.mrb[0].mxu0
  %158 = vmatprep.mubr.f32.mxu0 0.0
  %159 = vmatmul.mubr.f32.gmra.mrb[0].mxu0 %v59
  %v160 = vpop.f32.mrb[0].mxu0
  %v161 = vadd.f32 0.0, %v160
  %v162 = vpop.f32.mrb[0].mxu0
  %163 = vmatprep.mubr.f32.mxu0 0.0
  %164 = vmatmul.mubr.f32.gmra.mrb[0].mxu0 %v62
  %v165 = vpop.f32.mrb[0].mxu0
  %v166 = vadd.f32 0.0, %v165
  %v167 = vpop.f32.mrb[0].mxu0
  %168 = vdwg.mxu0
  %v169 = vld [vmem:[%s2] sm:$0xff]
  %v170 = vld [vmem:[%s2 + $0x8] sm:$0xff]
  %v171 = vld [vmem:[%s5] sm:$0x1]
  %v172 = vlaneseq
  %v173 = vshrl.u32 %v172, 7
  %v174 = vsub.s32 0, %v173
  %v175 = vrot.slane %v171, %v174
  %vm176 = vcmask 130048
  %v178 = vsel %vm176, %v131, 0
  %v181 = vsel %vm176, %v136, 0
  %v184 = vsel %vm176, %v141, 0
  %v187 = vsel %vm176, %v146, 0
  %v190 = vsel %vm176, %v151, 0
  %v193 = vsel %vm176, %v156, 0
  %v196 = vsel %vm176, %v161, 0
  %v199 = vsel %vm176, %v166, 0
  %201 = vmatprep.subr.mxu0 0.0
  %202 = vmatpush1.msra.mxu0 %v169
  %203 = vmatprep.subr.mxu0 0.0
  %204 = vmatpush1.msra.mxu0 %v170
  %205 = vmatprep.subr.mxu0 0.0
  %206 = vmatpush1.msra.mxu0 0.0
  %207 = vmatprep.subr.mxu0 0.0
  %208 = vmatpush1.msra.mxu0 0.0
  %209 = vmatprep.subr.mxu0 0.0
  %210 = vmatpush1.msra.mxu0 0.0
  %211 = vmatprep.subr.mxu0 0.0
  %212 = vmatpush1.msra.mxu0 0.0
  %213 = vmatprep.subr.mxu0 0.0
  %214 = vmatpush1.msra.mxu0 0.0
  %215 = vmatprep.subr.mxu0 0.0
  %216 = vmatpush1.msra.mxu0 0.0
  %217 = vmatprep.subr.mxu0 0.0
  %218 = vmatpush1.msra.mxu0 0.0
  %219 = vmatprep.subr.mxu0 0.0
  %220 = vmatpush1.msra.mxu0 0.0
  %221 = vmatprep.subr.mxu0 0.0
  %222 = vmatpush1.msra.mxu0 0.0
  %223 = vmatprep.subr.mxu0 0.0
  %224 = vmatpush1.msra.mxu0 0.0
  %225 = vmatprep.subr.mxu0 0.0
  %226 = vmatpush1.msra.mxu0 0.0
  %227 = vmatprep.subr.mxu0 0.0
  %228 = vmatpush1.msra.mxu0 0.0
  %229 = vmatprep.subr.mxu0 0.0
  %230 = vmatpush1.msra.mxu0 0.0
  %231 = vmatprep.subr.mxu0 0.0
  %232 = vmatpush1.msra.mxu0 0.0
  %233 = vmatprep.subr.mxu0 0.0
  %234 = vmatpush1.msra.mxu0 0.0
  %235 = vmatprep.subr.mxu0 0.0
  %236 = vmatpush1.msra.mxu0 0.0
  %237 = vmatprep.subr.mxu0 0.0
  %238 = vmatpush1.msra.mxu0 0.0
  %239 = vmatprep.subr.mxu0 0.0
  %240 = vmatpush1.msra.mxu0 0.0
  %241 = vmatprep.subr.mxu0 0.0
  %242 = vmatpush1.msra.mxu0 0.0
  %243 = vmatprep.subr.mxu0 0.0
  %244 = vmatpush1.msra.mxu0 0.0
  %245 = vmatprep.subr.mxu0 0.0
  %246 = vmatpush1.msra.mxu0 0.0
  %247 = vmatprep.subr.mxu0 0.0
  %248 = vmatpush1.msra.mxu0 0.0
  %249 = vmatprep.subr.mxu0 0.0
  %250 = vmatpush1.msra.mxu0 0.0
  %251 = vmatprep.subr.mxu0 0.0
  %252 = vmatpush1.msra.mxu0 0.0
  %253 = vmatprep.subr.mxu0 0.0
  %254 = vmatpush1.msra.mxu0 0.0
  %255 = vmatprep.subr.mxu0 0.0
  %256 = vmatpush1.msra.mxu0 0.0
  %257 = vmatprep.subr.mxu0 0.0
  %258 = vmatpush1.msra.mxu0 0.0
  %259 = vmatprep.subr.mxu0 0.0
  %260 = vmatpush1.msra.mxu0 0.0
  %261 = vmatprep.subr.mxu0 0.0
  %262 = vmatpush1.msra.mxu0 0.0
  %263 = vmatprep.subr.mxu0 0.0
  %264 = vmatpush1.msra.mxu0 0.0
  %265 = vmatprep.mubr.f32.mxu0 0.0
  %266 = vmatmul.mubr.f32.gmra.mrb[0].mxu0 %v178
  %v267 = vpop.f32.mrb[0].mxu0
  %v268 = vadd.f32 %v175, %v267
  %v269 = vpop.f32.mrb[0].mxu0
  %270 = vmatprep.mubr.f32.mxu0 0.0
  %271 = vmatmul.mubr.f32.gmra.mrb[0].mxu0 %v181
  %v272 = vpop.f32.mrb[0].mxu0
  %v273 = vadd.f32 %v175, %v272
  %v274 = vpop.f32.mrb[0].mxu0
  %275 = vmatprep.mubr.f32.mxu0 0.0
  %276 = vmatmul.mubr.f32.gmra.mrb[0].mxu0 %v184
  %v277 = vpop.f32.mrb[0].mxu0
  %v278 = vadd.f32 %v175, %v277
  %v279 = vpop.f32.mrb[0].mxu0
  %280 = vmatprep.mubr.f32.mxu0 0.0
  %281 = vmatmul.mubr.f32.gmra.mrb[0].mxu0 %v187
  %v282 = vpop.f32.mrb[0].mxu0
  %v283 = vadd.f32 %v175, %v282
  %v284 = vpop.f32.mrb[0].mxu0
  %285 = vmatprep.mubr.f32.mxu0 0.0
  %286 = vmatmul.mubr.f32.gmra.mrb[0].mxu0 %v190
  %v287 = vpop.f32.mrb[0].mxu0
  %v288 = vadd.f32 %v175, %v287
  %v289 = vpop.f32.mrb[0].mxu0
  %290 = vmatprep.mubr.f32.mxu0 0.0
  %291 = vmatmul.mubr.f32.gmra.mrb[0].mxu0 %v193
  %v292 = vpop.f32.mrb[0].mxu0
  %v293 = vadd.f32 %v175, %v292
  %v294 = vpop.f32.mrb[0].mxu0
  %295 = vmatprep.mubr.f32.mxu0 0.0
  %296 = vmatmul.mubr.f32.gmra.mrb[0].mxu0 %v196
  %v297 = vpop.f32.mrb[0].mxu0
  %v298 = vadd.f32 %v175, %v297
  %v299 = vpop.f32.mrb[0].mxu0
  %300 = vmatprep.mubr.f32.mxu0 0.0
  %301 = vmatmul.mubr.f32.gmra.mrb[0].mxu0 %v199
  %v302 = vpop.f32.mrb[0].mxu0
  %v303 = vadd.f32 %v175, %v302
  %v304 = vpop.f32.mrb[0].mxu0
  %305 = vdwg.mxu0
  %v306 = vtanh.pop %v268
  %v307 = vtanh.pop %v273
  %v308 = vtanh.pop %v278
  %v309 = vtanh.pop %v283
  %v310 = vtanh.pop %v288
  %v311 = vtanh.pop %v293
  %v312 = vtanh.pop %v298
  %v313 = vtanh.pop %v303
  %v314 = vld [vmem:[%s3] sm:$0xff]
  %v315 = vld [vmem:[%s3 + $0x8] sm:$0xff]
  %v316 = vld [vmem:[%s3 + $0x10] sm:$0xff]
  %v317 = vld [vmem:[%s3 + $0x18] sm:$0xff]
  %v318 = vld [vmem:[%s3 + $0x20] sm:$0xff]
  %v319 = vld [vmem:[%s3 + $0x28] sm:$0xff]
  %v320 = vld [vmem:[%s3 + $0x30] sm:$0xff]
  %v321 = vld [vmem:[%s3 + $0x38] sm:$0xff]
  %v323 = vsel %vm39, %v306, 0
  %v326 = vsel %vm39, %v307, 0
  %v329 = vsel %vm39, %v308, 0
  %v332 = vsel %vm39, %v309, 0
  %v335 = vsel %vm39, %v310, 0
  %v338 = vsel %vm39, %v311, 0
  %v341 = vsel %vm39, %v312, 0
  %v344 = vsel %vm39, %v313, 0
  %346 = vmatprep.subr.mxu0 0.0
  %347 = vmatpush1.msra.mxu0 %v314
  %348 = vmatprep.subr.mxu0 0.0
  %349 = vmatpush1.msra.mxu0 %v315
  %350 = vmatprep.subr.mxu0 0.0
  %351 = vmatpush1.msra.mxu0 %v316
  %352 = vmatprep.subr.mxu0 0.0
  %353 = vmatpush1.msra.mxu0 %v317
  %354 = vmatprep.subr.mxu0 0.0
  %355 = vmatpush1.msra.mxu0 %v318
  %356 = vmatprep.subr.mxu0 0.0
  %357 = vmatpush1.msra.mxu0 %v319
  %358 = vmatprep.subr.mxu0 0.0
  %359 = vmatpush1.msra.mxu0 %v320
  %360 = vmatprep.subr.mxu0 0.0
  %361 = vmatpush1.msra.mxu0 %v321
  %362 = vmatprep.subr.mxu0 0.0
  %363 = vmatpush1.msra.mxu0 0.0
  %364 = vmatprep.subr.mxu0 0.0
  %365 = vmatpush1.msra.mxu0 0.0
  %366 = vmatprep.subr.mxu0 0.0
  %367 = vmatpush1.msra.mxu0 0.0
  %368 = vmatprep.subr.mxu0 0.0
  %369 = vmatpush1.msra.mxu0 0.0
  %370 = vmatprep.subr.mxu0 0.0
  %371 = vmatpush1.msra.mxu0 0.0
  %372 = vmatprep.subr.mxu0 0.0
  %373 = vmatpush1.msra.mxu0 0.0
  %374 = vmatprep.subr.mxu0 0.0
  %375 = vmatpush1.msra.mxu0 0.0
  %376 = vmatprep.subr.mxu0 0.0
  %377 = vmatpush1.msra.mxu0 0.0
  %378 = vmatprep.subr.mxu0 0.0
  %379 = vmatpush1.msra.mxu0 0.0
  %380 = vmatprep.subr.mxu0 0.0
  %381 = vmatpush1.msra.mxu0 0.0
  %382 = vmatprep.subr.mxu0 0.0
  %383 = vmatpush1.msra.mxu0 0.0
  %384 = vmatprep.subr.mxu0 0.0
  %385 = vmatpush1.msra.mxu0 0.0
  %386 = vmatprep.subr.mxu0 0.0
  %387 = vmatpush1.msra.mxu0 0.0
  %388 = vmatprep.subr.mxu0 0.0
  %389 = vmatpush1.msra.mxu0 0.0
  %390 = vmatprep.subr.mxu0 0.0
  %391 = vmatpush1.msra.mxu0 0.0
  %392 = vmatprep.subr.mxu0 0.0
  %393 = vmatpush1.msra.mxu0 0.0
  %394 = vmatprep.subr.mxu0 0.0
  %395 = vmatpush1.msra.mxu0 0.0
  %396 = vmatprep.subr.mxu0 0.0
  %397 = vmatpush1.msra.mxu0 0.0
  %398 = vmatprep.subr.mxu0 0.0
  %399 = vmatpush1.msra.mxu0 0.0
  %400 = vmatprep.subr.mxu0 0.0
  %401 = vmatpush1.msra.mxu0 0.0
  %402 = vmatprep.subr.mxu0 0.0
  %403 = vmatpush1.msra.mxu0 0.0
  %404 = vmatprep.subr.mxu0 0.0
  %405 = vmatpush1.msra.mxu0 0.0
  %406 = vmatprep.subr.mxu0 0.0
  %407 = vmatpush1.msra.mxu0 0.0
  %408 = vmatprep.subr.mxu0 0.0
  %409 = vmatpush1.msra.mxu0 0.0
  %410 = vmatprep.mubr.f32.mxu0 0.0
  %411 = vmatmul.mubr.f32.gmra.mrb[0].mxu0 %v323
  %v412 = vpop.f32.mrb[0].mxu0
  %v413 = vadd.f32 0.0, %v412
  %v414 = vpop.f32.mrb[0].mxu0
  %415 = vmatprep.mubr.f32.mxu0 0.0
  %416 = vmatmul.mubr.f32.gmra.mrb[0].mxu0 %v326
  %v417 = vpop.f32.mrb[0].mxu0
  %v418 = vadd.f32 0.0, %v417
  %v419 = vpop.f32.mrb[0].mxu0
  %420 = vmatprep.mubr.f32.mxu0 0.0
  %421 = vmatmul.mubr.f32.gmra.mrb[0].mxu0 %v329
  %v422 = vpop.f32.mrb[0].mxu0
  %v423 = vadd.f32 0.0, %v422
  %v424 = vpop.f32.mrb[0].mxu0
  %425 = vmatprep.mubr.f32.mxu0 0.0
  %426 = vmatmul.mubr.f32.gmra.mrb[0].mxu0 %v332
  %v427 = vpop.f32.mrb[0].mxu0
  %v428 = vadd.f32 0.0, %v427
  %v429 = vpop.f32.mrb[0].mxu0
  %430 = vmatprep.mubr.f32.mxu0 0.0
  %431 = vmatmul.mubr.f32.gmra.mrb[0].mxu0 %v335
  %v432 = vpop.f32.mrb[0].mxu0
  %v433 = vadd.f32 0.0, %v432
  %v434 = vpop.f32.mrb[0].mxu0
  %435 = vmatprep.mubr.f32.mxu0 0.0
  %436 = vmatmul.mubr.f32.gmra.mrb[0].mxu0 %v338
  %v437 = vpop.f32.mrb[0].mxu0
  %v438 = vadd.f32 0.0, %v437
  %v439 = vpop.f32.mrb[0].mxu0
  %440 = vmatprep.mubr.f32.mxu0 0.0
  %441 = vmatmul.mubr.f32.gmra.mrb[0].mxu0 %v341
  %v442 = vpop.f32.mrb[0].mxu0
  %v443 = vadd.f32 0.0, %v442
  %v444 = vpop.f32.mrb[0].mxu0
  %445 = vmatprep.mubr.f32.mxu0 0.0
  %446 = vmatmul.mubr.f32.gmra.mrb[0].mxu0 %v344
  %v447 = vpop.f32.mrb[0].mxu0
  %v448 = vadd.f32 0.0, %v447
  %v449 = vpop.f32.mrb[0].mxu0
  %450 = vdwg.mxu0
  %v451 = vld [vmem:[%s5 + $0x1] sm:$0x1]
  %v452 = vlaneseq
  %v453 = vshrl.u32 %v452, 7
  %v454 = vsub.s32 0, %v453
  %v455 = vrot.slane %v451, %v454
  %456 = vmatprep.subr.mxu0 0.0
  %457 = vmatpush1.msra.mxu0 %v413
  %458 = vmatprep.subr.mxu0 0.0
  %459 = vmatpush1.msra.mxu0 %v418
  %460 = vmatprep.subr.mxu0 0.0
  %461 = vmatpush1.msra.mxu0 %v423
  %462 = vmatprep.subr.mxu0 0.0
  %463 = vmatpush1.msra.mxu0 %v428
  %464 = vmatprep.subr.mxu0 0.0
  %465 = vmatpush1.msra.mxu0 %v433
  %466 = vmatprep.subr.mxu0 0.0
  %467 = vmatpush1.msra.mxu0 %v438
  %468 = vmatprep.subr.mxu0 0.0
  %469 = vmatpush1.msra.mxu0 %v443
  %470 = vmatprep.subr.mxu0 0.0
  %471 = vmatpush1.msra.mxu0 %v448
  %472 = vmatprep.subr.mxu0 0.0
  %473 = vmatpush1.msra.mxu0 0.0
  %474 = vmatprep.subr.mxu0 0.0
  %475 = vmatpush1.msra.mxu0 0.0
  %476 = vmatprep.subr.mxu0 0.0
  %477 = vmatpush1.msra.mxu0 0.0
  %478 = vmatprep.subr.mxu0 0.0
  %479 = vmatpush1.msra.mxu0 0.0
  %480 = vmatprep.subr.mxu0 0.0
  %481 = vmatpush1.msra.mxu0 0.0
  %482 = vmatprep.subr.mxu0 0.0
  %483 = vmatpush1.msra.mxu0 0.0
  %484 = vmatprep.subr.mxu0 0.0
  %485 = vmatpush1.msra.mxu0 0.0
  %486 = vmatprep.subr.mxu0 0.0
  %487 = vmatpush1.msra.mxu0 0.0
  %488 = vmatprep.subr.mxu0 0.0
  %489 = vmatpush1.msra.mxu0 0.0
  %490 = vmatprep.subr.mxu0 0.0
  %491 = vmatpush1.msra.mxu0 0.0
  %492 = vmatprep.subr.mxu0 0.0
  %493 = vmatpush1.msra.mxu0 0.0
  %494 = vmatprep.subr.mxu0 0.0
  %495 = vmatpush1.msra.mxu0 0.0
  %496 = vmatprep.subr.mxu0 0.0
  %497 = vmatpush1.msra.mxu0 0.0
  %498 = vmatprep.subr.mxu0 0.0
  %499 = vmatpush1.msra.mxu0 0.0
  %500 = vmatprep.subr.mxu0 0.0
  %501 = vmatpush1.msra.mxu0 0.0
  %502 = vmatprep.subr.mxu0 0.0
  %503 = vmatpush1.msra.mxu0 0.0
  %504 = vmatprep.subr.mxu0 0.0
  %505 = vmatpush1.msra.mxu0 0.0
  %506 = vmatprep.subr.mxu0 0.0
  %507 = vmatpush1.msra.mxu0 0.0
  %508 = vmatprep.subr.mxu0 0.0
  %509 = vmatpush1.msra.mxu0 0.0
  %510 = vmatprep.subr.mxu0 0.0
  %511 = vmatpush1.msra.mxu0 0.0
  %512 = vmatprep.subr.mxu0 0.0
  %513 = vmatpush1.msra.mxu0 0.0
  %514 = vmatprep.subr.mxu0 0.0
  %515 = vmatpush1.msra.mxu0 0.0
  %516 = vmatprep.subr.mxu0 0.0
  %517 = vmatpush1.msra.mxu0 0.0
  %518 = vmatprep.subr.mxu0 0.0
  %519 = vmatpush1.msra.mxu0 0.0
  %520 = vmatprep.mubr.f32.mxu0 0.0
  %521 = vmatmul.mubr.f32.gmra.mrb[0].mxu0 %v41
  %v522 = vpop.f32.mrb[0].mxu0
  %v523 = vadd.f32 %v455, %v522
  %v524 = vpop.f32.mrb[0].mxu0
  %525 = vmatprep.mubr.f32.mxu0 0.0
  %526 = vmatmul.mubr.f32.gmra.mrb[0].mxu0 %v44
  %v527 = vpop.f32.mrb[0].mxu0
  %v528 = vadd.f32 %v455, %v527
  %v529 = vpop.f32.mrb[0].mxu0
  %530 = vmatprep.mubr.f32.mxu0 0.0
  %531 = vmatmul.mubr.f32.gmra.mrb[0].mxu0 %v47
  %v532 = vpop.f32.mrb[0].mxu0
  %v533 = vadd.f32 %v455, %v532
  %v534 = vpop.f32.mrb[0].mxu0
  %535 = vmatprep.mubr.f32.mxu0 0.0
  %536 = vmatmul.mubr.f32.gmra.mrb[0].mxu0 %v50
  %v537 = vpop.f32.mrb[0].mxu0
  %v538 = vadd.f32 %v455, %v537
  %v539 = vpop.f32.mrb[0].mxu0
  %540 = vmatprep.mubr.f32.mxu0 0.0
  %541 = vmatmul.mubr.f32.gmra.mrb[0].mxu0 %v53
  %v542 = vpop.f32.mrb[0].mxu0
  %v543 = vadd.f32 %v455, %v542
  %v544 = vpop.f32.mrb[0].mxu0
  %545 = vmatprep.mubr.f32.mxu0 0.0
  %546 = vmatmul.mubr.f32.gmra.mrb[0].mxu0 %v56
  %v547 = vpop.f32.mrb[0].mxu0
  %v548 = vadd.f32 %v455, %v547
  %v549 = vpop.f32.mrb[0].mxu0
  %550 = vmatprep.mubr.f32.mxu0 0.0
  %551 = vmatmul.mubr.f32.gmra.mrb[0].mxu0 %v59
  %v552 = vpop.f32.mrb[0].mxu0
  %v553 = vadd.f32 %v455, %v552
  %v554 = vpop.f32.mrb[0].mxu0
  %555 = vmatprep.mubr.f32.mxu0 0.0
  %556 = vmatmul.mubr.f32.gmra.mrb[0].mxu0 %v62
  %v557 = vpop.f32.mrb[0].mxu0
  %v558 = vadd.f32 %v455, %v557
  %v559 = vpop.f32.mrb[0].mxu0
  %560 = vdwg.mxu0
  %v561 = vtanh.pop %v523
  %v562 = vtanh.pop %v528
  %v563 = vtanh.pop %v533
  %v564 = vtanh.pop %v538
  %v565 = vtanh.pop %v543
  %v566 = vtanh.pop %v548
  %v567 = vtanh.pop %v553
  %v568 = vtanh.pop %v558
  %v569 = vmax.f32 %v306, %v561
  %v570 = vmax.f32 %v307, %v562
  %v571 = vmax.f32 %v308, %v563
  %v572 = vmax.f32 %v309, %v564
  %v573 = vmax.f32 %v310, %v565
  %v574 = vmax.f32 %v311, %v566
  %v575 = vmax.f32 %v312, %v567
  %v576 = vmax.f32 %v313, %v568
  %v577 = vld [vmem:[%s4] sm:$0xff]
  %v578 = vld [vmem:[%s4 + $0x8] sm:$0xff]
  %v579 = vld [vmem:[%s4 + $0x10] sm:$0xff]
  %v580 = vld [vmem:[%s4 + $0x18] sm:$0xff]
  %v581 = vld [vmem:[%s4 + $0x20] sm:$0xff]
  %v582 = vld [vmem:[%s4 + $0x28] sm:$0xff]
  %v583 = vld [vmem:[%s4 + $0x30] sm:$0xff]
  %v584 = vld [vmem:[%s4 + $0x38] sm:$0xff]
  %v585 = vld [vmem:[%s5 + $0x2] sm:$0x1]
  %v586 = vlaneseq
  %v587 = vshrl.u32 %v586, 7
  %v588 = vsub.s32 0, %v587
  %v589 = vrot.slane %v585, %v588
  %v591 = vsel %vm39, %v569, 0
  %v594 = vsel %vm39, %v570, 0
  %v597 = vsel %vm39, %v571, 0
  %v600 = vsel %vm39, %v572, 0
  %v603 = vsel %vm39, %v573, 0
  %v606 = vsel %vm39, %v574, 0
  %v609 = vsel %vm39, %v575, 0
  %v612 = vsel %vm39, %v576, 0
  %614 = vmatprep.subr.mxu0 0.0
  %615 = vmatpush1.msra.mxu0 %v577
  %616 = vmatprep.subr.mxu0 0.0
  %617 = vmatpush1.msra.mxu0 %v578
  %618 = vmatprep.subr.mxu0 0.0
  %619 = vmatpush1.msra.mxu0 %v579
  %620 = vmatprep.subr.mxu0 0.0
  %621 = vmatpush1.msra.mxu0 %v580
  %622 = vmatprep.subr.mxu0 0.0
  %623 = vmatpush1.msra.mxu0 %v581
  %624 = vmatprep.subr.mxu0 0.0
  %625 = vmatpush1.msra.mxu0 %v582
  %626 = vmatprep.subr.mxu0 0.0
  %627 = vmatpush1.msra.mxu0 %v583
  %628 = vmatprep.subr.mxu0 0.0
  %629 = vmatpush1.msra.mxu0 %v584
  %630 = vmatprep.subr.mxu0 0.0
  %631 = vmatpush1.msra.mxu0 0.0
  %632 = vmatprep.subr.mxu0 0.0
  %633 = vmatpush1.msra.mxu0 0.0
  %634 = vmatprep.subr.mxu0 0.0
  %635 = vmatpush1.msra.mxu0 0.0
  %636 = vmatprep.subr.mxu0 0.0
  %637 = vmatpush1.msra.mxu0 0.0
  %638 = vmatprep.subr.mxu0 0.0
  %639 = vmatpush1.msra.mxu0 0.0
  %640 = vmatprep.subr.mxu0 0.0
  %641 = vmatpush1.msra.mxu0 0.0
  %642 = vmatprep.subr.mxu0 0.0
  %643 = vmatpush1.msra.mxu0 0.0
  %644 = vmatprep.subr.mxu0 0.0
  %645 = vmatpush1.msra.mxu0 0.0
  %646 = vmatprep.subr.mxu0 0.0
  %647 = vmatpush1.msra.mxu0 0.0
  %648 = vmatprep.subr.mxu0 0.0
  %649 = vmatpush1.msra.mxu0 0.0
  %650 = vmatprep.subr.mxu0 0.0
  %651 = vmatpush1.msra.mxu0 0.0
  %652 = vmatprep.subr.mxu0 0.0
  %653 = vmatpush1.msra.mxu0 0.0
  %654 = vmatprep.subr.mxu0 0.0
  %655 = vmatpush1.msra.mxu0 0.0
  %656 = vmatprep.subr.mxu0 0.0
  %657 = vmatpush1.msra.mxu0 0.0
  %658 = vmatprep.subr.mxu0 0.0
  %659 = vmatpush1.msra.mxu0 0.0
  %660 = vmatprep.subr.mxu0 0.0
  %661 = vmatpush1.msra.mxu0 0.0
  %662 = vmatprep.subr.mxu0 0.0
  %663 = vmatpush1.msra.mxu0 0.0
  %664 = vmatprep.subr.mxu0 0.0
  %665 = vmatpush1.msra.mxu0 0.0
  %666 = vmatprep.subr.mxu0 0.0
  %667 = vmatpush1.msra.mxu0 0.0
  %668 = vmatprep.subr.mxu0 0.0
  %669 = vmatpush1.msra.mxu0 0.0
  %670 = vmatprep.subr.mxu0 0.0
  %671 = vmatpush1.msra.mxu0 0.0
  %672 = vmatprep.subr.mxu0 0.0
  %673 = vmatpush1.msra.mxu0 0.0
  %674 = vmatprep.subr.mxu0 0.0
  %675 = vmatpush1.msra.mxu0 0.0
  %676 = vmatprep.subr.mxu0 0.0
  %677 = vmatpush1.msra.mxu0 0.0
  %678 = vmatprep.mubr.f32.mxu0 0.0
  %679 = vmatmul.mubr.f32.gmra.mrb[0].mxu0 %v591
  %v680 = vpop.f32.mrb[0].mxu0
  %v681 = vadd.f32 %v589, %v680
  %v682 = vpop.f32.mrb[0].mxu0
  %683 = vmatprep.mubr.f32.mxu0 0.0
  %684 = vmatmul.mubr.f32.gmra.mrb[0].mxu0 %v594
  %v685 = vpop.f32.mrb[0].mxu0
  %v686 = vadd.f32 %v589, %v685
  %v687 = vpop.f32.mrb[0].mxu0
  %688 = vmatprep.mubr.f32.mxu0 0.0
  %689 = vmatmul.mubr.f32.gmra.mrb[0].mxu0 %v597
  %v690 = vpop.f32.mrb[0].mxu0
  %v691 = vadd.f32 %v589, %v690
  %v692 = vpop.f32.mrb[0].mxu0
  %693 = vmatprep.mubr.f32.mxu0 0.0
  %694 = vmatmul.mubr.f32.gmra.mrb[0].mxu0 %v600
  %v695 = vpop.f32.mrb[0].mxu0
  %v696 = vadd.f32 %v589, %v695
  %v697 = vpop.f32.mrb[0].mxu0
  %698 = vmatprep.mubr.f32.mxu0 0.0
  %699 = vmatmul.mubr.f32.gmra.mrb[0].mxu0 %v603
  %v700 = vpop.f32.mrb[0].mxu0
  %v701 = vadd.f32 %v589, %v700
  %v702 = vpop.f32.mrb[0].mxu0
  %703 = vmatprep.mubr.f32.mxu0 0.0
  %704 = vmatmul.mubr.f32.gmra.mrb[0].mxu0 %v606
  %v705 = vpop.f32.mrb[0].mxu0
  %v706 = vadd.f32 %v589, %v705
  %v707 = vpop.f32.mrb[0].mxu0
  %708 = vmatprep.mubr.f32.mxu0 0.0
  %709 = vmatmul.mubr.f32.gmra.mrb[0].mxu0 %v609
  %v710 = vpop.f32.mrb[0].mxu0
  %v711 = vadd.f32 %v589, %v710
  %v712 = vpop.f32.mrb[0].mxu0
  %713 = vmatprep.mubr.f32.mxu0 0.0
  %714 = vmatmul.mubr.f32.gmra.mrb[0].mxu0 %v612
  %v715 = vpop.f32.mrb[0].mxu0
  %v716 = vadd.f32 %v589, %v715
  %v717 = vpop.f32.mrb[0].mxu0
  %718 = vdwg.mxu0
  %v719 = vld [vmem:[%s5 + $0x3] sm:$0x1]
  %v720 = vld [vmem:[%s5 + $0x4] sm:$0x1]
  %vm721 = vcmask 261120
  %v722 = vsel %vm721, %v681, 0.0
  %723 = vadd.xlane.f32.xlu0 %v722
  %v724 = vpop.xlane.xlu0 %723
  %v725 = vsel %vm721, %v686, 0.0
  %726 = vadd.xlane.f32.xlu0 %v725
  %v727 = vpop.xlane.xlu0 %726
  %v728 = vsel %vm721, %v691, 0.0
  %729 = vadd.xlane.f32.xlu0 %v728
  %v730 = vpop.xlane.xlu0 %729
  %v731 = vsel %vm721, %v696, 0.0
  %732 = vadd.xlane.f32.xlu0 %v731
  %v733 = vpop.xlane.xlu0 %732
  %v734 = vsel %vm721, %v701, 0.0
  %735 = vadd.xlane.f32.xlu0 %v734
  %v736 = vpop.xlane.xlu0 %735
  %v737 = vsel %vm721, %v706, 0.0
  %738 = vadd.xlane.f32.xlu0 %v737
  %v739 = vpop.xlane.xlu0 %738
  %v740 = vsel %vm721, %v711, 0.0
  %741 = vadd.xlane.f32.xlu0 %v740
  %v742 = vpop.xlane.xlu0 %741
  %v743 = vsel %vm721, %v716, 0.0
  %744 = vadd.xlane.f32.xlu0 %v743
  %v745 = vpop.xlane.xlu0 %744
  %v746 = vrcp.pop 32.0
  %v747 = vmul.f32 %v724, %v746
  %v748 = vmul.f32 %v727, %v746
  %v749 = vmul.f32 %v730, %v746
  %v750 = vmul.f32 %v733, %v746
  %v751 = vmul.f32 %v736, %v746
  %v752 = vmul.f32 %v739, %v746
  %v753 = vmul.f32 %v742, %v746
  %v754 = vmul.f32 %v745, %v746
  %v755 = vsub.f32 %v681, %v747
  %v756 = vsub.f32 %v686, %v748
  %v757 = vsub.f32 %v691, %v749
  %v758 = vsub.f32 %v696, %v750
  %v759 = vsub.f32 %v701, %v751
  %v760 = vsub.f32 %v706, %v752
  %v761 = vsub.f32 %v711, %v753
  %v762 = vsub.f32 %v716, %v754
  %v763 = vmul.f32 %v755, %v755
  %v764 = vmul.f32 %v756, %v756
  %v765 = vmul.f32 %v757, %v757
  %v766 = vmul.f32 %v758, %v758
  %v767 = vmul.f32 %v759, %v759
  %v768 = vmul.f32 %v760, %v760
  %v769 = vmul.f32 %v761, %v761
  %v770 = vmul.f32 %v762, %v762
  %v771 = vsel %vm721, %v763, 0.0
  %772 = vadd.xlane.f32.xlu0 %v771
  %v773 = vpop.xlane.xlu0 %772
  %v774 = vsel %vm721, %v764, 0.0
  %775 = vadd.xlane.f32.xlu0 %v774
  %v776 = vpop.xlane.xlu0 %775
  %v777 = vsel %vm721, %v765, 0.0
  %778 = vadd.xlane.f32.xlu0 %v777
  %v779 = vpop.xlane.xlu0 %778
  %v780 = vsel %vm721, %v766, 0.0
  %781 = vadd.xlane.f32.xlu0 %v780
  %v782 = vpop.xlane.xlu0 %781
  %v783 = vsel %vm721, %v767, 0.0
  %784 = vadd.xlane.f32.xlu0 %v783
  %v785 = vpop.xlane.xlu0 %784
  %v786 = vsel %vm721, %v768, 0.0
  %787 = vadd.xlane.f32.xlu0 %v786
  %v788 = vpop.xlane.xlu0 %787
  %v789 = vsel %vm721, %v769, 0.0
  %790 = vadd.xlane.f32.xlu0 %v789
  %v791 = vpop.xlane.xlu0 %790
  %v792 = vsel %vm721, %v770, 0.0
  %793 = vadd.xlane.f32.xlu0 %v792
  %v794 = vpop.xlane.xlu0 %793
  %v795 = vmul.f32 %v773, %v746
  %v796 = vmul.f32 %v776, %v746
  %v797 = vmul.f32 %v779, %v746
  %v798 = vmul.f32 %v782, %v746
  %v799 = vmul.f32 %v785, %v746
  %v800 = vmul.f32 %v788, %v746
  %v801 = vmul.f32 %v791, %v746
  %v802 = vmul.f32 %v794, %v746
  %v803 = vadd.f32 %v795, 1e-05
  %v804 = vadd.f32 %v796, 1e-05
  %v805 = vadd.f32 %v797, 1e-05
  %v806 = vadd.f32 %v798, 1e-05
  %v807 = vadd.f32 %v799, 1e-05
  %v808 = vadd.f32 %v800, 1e-05
  %v809 = vadd.f32 %v801, 1e-05
  %v810 = vadd.f32 %v802, 1e-05
  %v811 = vrsqrt.pop %v803
  %v812 = vrsqrt.pop %v804
  %v813 = vrsqrt.pop %v805
  %v814 = vrsqrt.pop %v806
  %v815 = vrsqrt.pop %v807
  %v816 = vrsqrt.pop %v808
  %v817 = vrsqrt.pop %v809
  %v818 = vrsqrt.pop %v810
  %v819 = vmul.f32 %v755, %v811
  %v820 = vmul.f32 %v756, %v812
  %v821 = vmul.f32 %v757, %v813
  %v822 = vmul.f32 %v758, %v814
  %v823 = vmul.f32 %v759, %v815
  %v824 = vmul.f32 %v760, %v816
  %v825 = vmul.f32 %v761, %v817
  %v826 = vmul.f32 %v762, %v818
  %v827 = vlaneseq
  %v828 = vshrl.u32 %v827, 7
  %v829 = vsub.s32 0, %v828
  %v830 = vrot.slane %v719, %v829
  %v831 = vmul.f32 %v819, %v830
  %v832 = vmul.f32 %v820, %v830
  %v833 = vmul.f32 %v821, %v830
  %v834 = vmul.f32 %v822, %v830
  %v835 = vmul.f32 %v823, %v830
  %v836 = vmul.f32 %v824, %v830
  %v837 = vmul.f32 %v825, %v830
  %v838 = vmul.f32 %v826, %v830
  %v839 = vlaneseq
  %v840 = vshrl.u32 %v839, 7
  %v841 = vsub.s32 0, %v840
  %v842 = vrot.slane %v720, %v841
  %v843 = vadd.f32 %v831, %v842
  %v844 = vadd.f32 %v832, %v842
  %v845 = vadd.f32 %v833, %v842
  %v846 = vadd.f32 %v834, %v842
  %v847 = vadd.f32 %v835, %v842
  %v848 = vadd.f32 %v836, %v842
  %v849 = vadd.f32 %v837, %v842
  %v850 = vadd.f32 %v838, %v842
  %859 = vrot.lane.b32.xlu0 %v681, 96
  %v860 = vpop.permute.xlu0 %859
  %861 = vrot.lane.b32.xlu0 %v686, 96
  %v862 = vpop.permute.xlu0 %861
  %863 = vrot.lane.b32.xlu0 %v691, 96
  %v864 = vpop.permute.xlu0 %863
  %865 = vrot.lane.b32.xlu0 %v696, 96
  %v866 = vpop.permute.xlu0 %865
  %867 = vrot.lane.b32.xlu0 %v701, 96
  %v868 = vpop.permute.xlu0 %867
  %869 = vrot.lane.b32.xlu0 %v706, 96
  %v870 = vpop.permute.xlu0 %869
  %871 = vrot.lane.b32.xlu0 %v711, 96
  %v872 = vpop.permute.xlu0 %871
  %873 = vrot.lane.b32.xlu0 %v716, 96
  %v874 = vpop.permute.xlu0 %873
  %v883 = vsel %vm721, %v860, 0.0
  %884 = vadd.xlane.f32.xlu0 %v883
  %v885 = vpop.xlane.xlu0 %884
  %v886 = vsel %vm721, %v862, 0.0
  %887 = vadd.xlane.f32.xlu0 %v886
  %v888 = vpop.xlane.xlu0 %887
  %v889 = vsel %vm721, %v864, 0.0
  %890 = vadd.xlane.f32.xlu0 %v889
  %v891 = vpop.xlane.xlu0 %890
  %v892 = vsel %vm721, %v866, 0.0
  %893 = vadd.xlane.f32.xlu0 %v892
  %v894 = vpop.xlane.xlu0 %893
  %v895 = vsel %vm721, %v868, 0.0
  %896 = vadd.xlane.f32.xlu0 %v895
  %v897 = vpop.xlane.xlu0 %896
  %v898 = vsel %vm721, %v870, 0.0
  %899 = vadd.xlane.f32.xlu0 %v898
  %v900 = vpop.xlane.xlu0 %899
  %v901 = vsel %vm721, %v872, 0.0
  %902 = vadd.xlane.f32.xlu0 %v901
  %v903 = vpop.xlane.xlu0 %902
  %v904 = vsel %vm721, %v874, 0.0
  %905 = vadd.xlane.f32.xlu0 %v904
  %v906 = vpop.xlane.xlu0 %905
  %v907 = vmul.f32 %v885, %v746
  %v908 = vmul.f32 %v888, %v746
  %v909 = vmul.f32 %v891, %v746
  %v910 = vmul.f32 %v894, %v746
  %v911 = vmul.f32 %v897, %v746
  %v912 = vmul.f32 %v900, %v746
  %v913 = vmul.f32 %v903, %v746
  %v914 = vmul.f32 %v906, %v746
  %v915 = vsub.f32 %v681, %v907
  %v916 = vsub.f32 %v686, %v908
  %v917 = vsub.f32 %v691, %v909
  %v918 = vsub.f32 %v696, %v910
  %v919 = vsub.f32 %v701, %v911
  %v920 = vsub.f32 %v706, %v912
  %v921 = vsub.f32 %v711, %v913
  %v922 = vsub.f32 %v716, %v914
  %v923 = vmul.f32 %v915, %v915
  %v924 = vmul.f32 %v916, %v916
  %v925 = vmul.f32 %v917, %v917
  %v926 = vmul.f32 %v918, %v918
  %v927 = vmul.f32 %v919, %v919
  %v928 = vmul.f32 %v920, %v920
  %v929 = vmul.f32 %v921, %v921
  %v930 = vmul.f32 %v922, %v922
  %939 = vrot.lane.b32.xlu0 %v923, 96
  %v940 = vpop.permute.xlu0 %939
  %941 = vrot.lane.b32.xlu0 %v924, 96
  %v942 = vpop.permute.xlu0 %941
  %943 = vrot.lane.b32.xlu0 %v925, 96
  %v944 = vpop.permute.xlu0 %943
  %945 = vrot.lane.b32.xlu0 %v926, 96
  %v946 = vpop.permute.xlu0 %945
  %947 = vrot.lane.b32.xlu0 %v927, 96
  %v948 = vpop.permute.xlu0 %947
  %949 = vrot.lane.b32.xlu0 %v928, 96
  %v950 = vpop.permute.xlu0 %949
  %951 = vrot.lane.b32.xlu0 %v929, 96
  %v952 = vpop.permute.xlu0 %951
  %953 = vrot.lane.b32.xlu0 %v930, 96
  %v954 = vpop.permute.xlu0 %953
  %v963 = vsel %vm721, %v940, 0.0
  %964 = vadd.xlane.f32.xlu0 %v963
  %v965 = vpop.xlane.xlu0 %964
  %v966 = vsel %vm721, %v942, 0.0
  %967 = vadd.xlane.f32.xlu0 %v966
  %v968 = vpop.xlane.xlu0 %967
  %v969 = vsel %vm721, %v944, 0.0
  %970 = vadd.xlane.f32.xlu0 %v969
  %v971 = vpop.xlane.xlu0 %970
  %v972 = vsel %vm721, %v946, 0.0
  %973 = vadd.xlane.f32.xlu0 %v972
  %v974 = vpop.xlane.xlu0 %973
  %v975 = vsel %vm721, %v948, 0.0
  %976 = vadd.xlane.f32.xlu0 %v975
  %v977 = vpop.xlane.xlu0 %976
  %v978 = vsel %vm721, %v950, 0.0
  %979 = vadd.xlane.f32.xlu0 %v978
  %v980 = vpop.xlane.xlu0 %979
  %v981 = vsel %vm721, %v952, 0.0
  %982 = vadd.xlane.f32.xlu0 %v981
  %v983 = vpop.xlane.xlu0 %982
  %v984 = vsel %vm721, %v954, 0.0
  %985 = vadd.xlane.f32.xlu0 %v984
  %v986 = vpop.xlane.xlu0 %985
  %v987 = vmul.f32 %v965, %v746
  %v988 = vmul.f32 %v968, %v746
  %v989 = vmul.f32 %v971, %v746
  %v990 = vmul.f32 %v974, %v746
  %v991 = vmul.f32 %v977, %v746
  %v992 = vmul.f32 %v980, %v746
  %v993 = vmul.f32 %v983, %v746
  %v994 = vmul.f32 %v986, %v746
  %v995 = vadd.f32 %v987, 1e-05
  %v996 = vadd.f32 %v988, 1e-05
  %v997 = vadd.f32 %v989, 1e-05
  %v998 = vadd.f32 %v990, 1e-05
  %v999 = vadd.f32 %v991, 1e-05
  %v1000 = vadd.f32 %v992, 1e-05
  %v1001 = vadd.f32 %v993, 1e-05
  %v1002 = vadd.f32 %v994, 1e-05
  %v1003 = vrsqrt.pop %v995
  %v1004 = vrsqrt.pop %v996
  %v1005 = vrsqrt.pop %v997
  %v1006 = vrsqrt.pop %v998
  %v1007 = vrsqrt.pop %v999
  %v1008 = vrsqrt.pop %v1000
  %v1009 = vrsqrt.pop %v1001
  %v1010 = vrsqrt.pop %v1002
  %v1011 = vmul.f32 %v915, %v1003
  %v1012 = vmul.f32 %v916, %v1004
  %v1013 = vmul.f32 %v917, %v1005
  %v1014 = vmul.f32 %v918, %v1006
  %v1015 = vmul.f32 %v919, %v1007
  %v1016 = vmul.f32 %v920, %v1008
  %v1017 = vmul.f32 %v921, %v1009
  %v1018 = vmul.f32 %v922, %v1010
  %v1019 = vmul.f32 %v1011, %v830
  %v1020 = vmul.f32 %v1012, %v830
  %v1021 = vmul.f32 %v1013, %v830
  %v1022 = vmul.f32 %v1014, %v830
  %v1023 = vmul.f32 %v1015, %v830
  %v1024 = vmul.f32 %v1016, %v830
  %v1025 = vmul.f32 %v1017, %v830
  %v1026 = vmul.f32 %v1018, %v830
  %v1027 = vadd.f32 %v1019, %v842
  %v1028 = vadd.f32 %v1020, %v842
  %v1029 = vadd.f32 %v1021, %v842
  %v1030 = vadd.f32 %v1022, %v842
  %v1031 = vadd.f32 %v1023, %v842
  %v1032 = vadd.f32 %v1024, %v842
  %v1033 = vadd.f32 %v1025, %v842
  %v1034 = vadd.f32 %v1026, %v842
  %1043 = vrot.lane.b32.xlu0 %v1027, 96
  %v1044 = vpop.permute.xlu0 %1043
  %1045 = vrot.lane.b32.xlu0 %v1028, 96
  %v1046 = vpop.permute.xlu0 %1045
  %1047 = vrot.lane.b32.xlu0 %v1029, 96
  %v1048 = vpop.permute.xlu0 %1047
  %1049 = vrot.lane.b32.xlu0 %v1030, 96
  %v1050 = vpop.permute.xlu0 %1049
  %1051 = vrot.lane.b32.xlu0 %v1031, 96
  %v1052 = vpop.permute.xlu0 %1051
  %1053 = vrot.lane.b32.xlu0 %v1032, 96
  %v1054 = vpop.permute.xlu0 %1053
  %1055 = vrot.lane.b32.xlu0 %v1033, 96
  %v1056 = vpop.permute.xlu0 %1055
  %1057 = vrot.lane.b32.xlu0 %v1034, 96
  %v1058 = vpop.permute.xlu0 %1057
  %v1067 = vadd.f32 %v843, %v1044
  %v1068 = vadd.f32 %v844, %v1046
  %v1069 = vadd.f32 %v845, %v1048
  %v1070 = vadd.f32 %v846, %v1050
  %v1071 = vadd.f32 %v847, %v1052
  %v1072 = vadd.f32 %v848, %v1054
  %v1073 = vadd.f32 %v849, %v1056
  %v1074 = vadd.f32 %v850, %v1058
  %v1075 = vmul.f32 %v1067, 0.5
  %v1076 = vmul.f32 %v1068, 0.5
  %v1077 = vmul.f32 %v1069, 0.5
  %v1078 = vmul.f32 %v1070, 0.5
  %v1079 = vmul.f32 %v1071, 0.5
  %v1080 = vmul.f32 %v1072, 0.5
  %v1081 = vmul.f32 %v1073, 0.5
  %v1082 = vmul.f32 %v1074, 0.5
  %v1083 = vsel %vm721, %v1075, 0.0
  %v1084 = vsel %vm721, %v1076, 0.0
  %v1085 = vadd.f32 %v1083, %v1084
  %v1086 = vsel %vm721, %v1077, 0.0
  %v1087 = vadd.f32 %v1085, %v1086
  %v1088 = vsel %vm721, %v1078, 0.0
  %v1089 = vadd.f32 %v1087, %v1088
  %v1090 = vsel %vm721, %v1079, 0.0
  %v1091 = vadd.f32 %v1089, %v1090
  %v1092 = vsel %vm721, %v1080, 0.0
  %v1093 = vadd.f32 %v1091, %v1092
  %v1094 = vsel %vm721, %v1081, 0.0
  %v1095 = vadd.f32 %v1093, %v1094
  %v1096 = vsel %vm721, %v1082, 0.0
  %v1097 = vadd.f32 %v1095, %v1096
  %v1098 = vrot.slane %v1097, 4
  %v1099 = vadd.f32 %v1097, %v1098
  %v1100 = vrot.slane %v1099, 2
  %v1101 = vadd.f32 %v1099, %v1100
  %v1102 = vrot.slane %v1101, 1
  %v1103 = vadd.f32 %v1101, %v1102
  %v1104 = vrcp.pop 64.0
  %v1105 = vmul.f32 %v1103, %v1104
  %v1106 = vsub.f32 %v1075, %v1105
  %v1107 = vsub.f32 %v1076, %v1105
  %v1108 = vsub.f32 %v1077, %v1105
  %v1109 = vsub.f32 %v1078, %v1105
  %v1110 = vsub.f32 %v1079, %v1105
  %v1111 = vsub.f32 %v1080, %v1105
  %v1112 = vsub.f32 %v1081, %v1105
  %v1113 = vsub.f32 %v1082, %v1105
  %v1114 = vmul.f32 %v1106, %v1106
  %v1115 = vmul.f32 %v1107, %v1107
  %v1116 = vmul.f32 %v1108, %v1108
  %v1117 = vmul.f32 %v1109, %v1109
  %v1118 = vmul.f32 %v1110, %v1110
  %v1119 = vmul.f32 %v1111, %v1111
  %v1120 = vmul.f32 %v1112, %v1112
  %v1121 = vmul.f32 %v1113, %v1113
  %v1122 = vsel %vm721, %v1114, 0.0
  %v1123 = vsel %vm721, %v1115, 0.0
  %v1124 = vadd.f32 %v1122, %v1123
  %v1125 = vsel %vm721, %v1116, 0.0
  %v1126 = vadd.f32 %v1124, %v1125
  %v1127 = vsel %vm721, %v1117, 0.0
  %v1128 = vadd.f32 %v1126, %v1127
  %v1129 = vsel %vm721, %v1118, 0.0
  %v1130 = vadd.f32 %v1128, %v1129
  %v1131 = vsel %vm721, %v1119, 0.0
  %v1132 = vadd.f32 %v1130, %v1131
  %v1133 = vsel %vm721, %v1120, 0.0
  %v1134 = vadd.f32 %v1132, %v1133
  %v1135 = vsel %vm721, %v1121, 0.0
  %v1136 = vadd.f32 %v1134, %v1135
  %v1137 = vrot.slane %v1136, 4
  %v1138 = vadd.f32 %v1136, %v1137
  %v1139 = vrot.slane %v1138, 2
  %v1140 = vadd.f32 %v1138, %v1139
  %v1141 = vrot.slane %v1140, 1
  %v1142 = vadd.f32 %v1140, %v1141
  %v1143 = vmul.f32 %v1142, %v1104
  %v1144 = vadd.f32 %v1143, 1e-05
  %v1145 = vrsqrt.pop %v1144
  %v1146 = vmul.f32 %v1106, %v1145
  %v1147 = vmul.f32 %v1107, %v1145
  %v1148 = vmul.f32 %v1108, %v1145
  %v1149 = vmul.f32 %v1109, %v1145
  %v1150 = vmul.f32 %v1110, %v1145
  %v1151 = vmul.f32 %v1111, %v1145
  %v1152 = vmul.f32 %v1112, %v1145
  %v1153 = vmul.f32 %v1113, %v1145
  %v1154 = vld [vmem:[%s5 + $0x5] sm:$0x1]
  %v1155 = vld [vmem:[%s5 + $0x6] sm:$0x1]
  %v1156 = vlaneseq
  %v1157 = vshrl.u32 %v1156, 7
  %v1158 = vsub.s32 0, %v1157
  %v1159 = vrot.slane %v1154, %v1158
  %v1160 = vmul.f32 %v1146, %v1159
  %v1161 = vmul.f32 %v1147, %v1159
  %v1162 = vmul.f32 %v1148, %v1159
  %v1163 = vmul.f32 %v1149, %v1159
  %v1164 = vmul.f32 %v1150, %v1159
  %v1165 = vmul.f32 %v1151, %v1159
  %v1166 = vmul.f32 %v1152, %v1159
  %v1167 = vmul.f32 %v1153, %v1159
  %v1168 = vlaneseq
  %v1169 = vshrl.u32 %v1168, 7
  %v1170 = vsub.s32 0, %v1169
  %v1171 = vrot.slane %v1155, %v1170
  %v1172 = vadd.f32 %v1160, %v1171
  %v1173 = vadd.f32 %v1161, %v1171
  %v1174 = vadd.f32 %v1162, %v1171
  %v1175 = vadd.f32 %v1163, %v1171
  %v1176 = vadd.f32 %v1164, %v1171
  %v1177 = vadd.f32 %v1165, %v1171
  %v1178 = vadd.f32 %v1166, %v1171
  %v1179 = vadd.f32 %v1167, %v1171
  %v1180 = vsel %vm721, %v1172, 0.0
  %1181 = vadd.xlane.f32.xlu0 %v1180
  %v1182 = vpop.xlane.xlu0 %1181
  %v1183 = vsel %vm721, %v1173, 0.0
  %1184 = vadd.xlane.f32.xlu0 %v1183
  %v1185 = vpop.xlane.xlu0 %1184
  %v1186 = vsel %vm721, %v1174, 0.0
  %1187 = vadd.xlane.f32.xlu0 %v1186
  %v1188 = vpop.xlane.xlu0 %1187
  %v1189 = vsel %vm721, %v1175, 0.0
  %1190 = vadd.xlane.f32.xlu0 %v1189
  %v1191 = vpop.xlane.xlu0 %1190
  %v1192 = vsel %vm721, %v1176, 0.0
  %1193 = vadd.xlane.f32.xlu0 %v1192
  %v1194 = vpop.xlane.xlu0 %1193
  %v1195 = vsel %vm721, %v1177, 0.0
  %1196 = vadd.xlane.f32.xlu0 %v1195
  %v1197 = vpop.xlane.xlu0 %1196
  %v1198 = vsel %vm721, %v1178, 0.0
  %1199 = vadd.xlane.f32.xlu0 %v1198
  %v1200 = vpop.xlane.xlu0 %1199
  %v1201 = vsel %vm721, %v1179, 0.0
  %1202 = vadd.xlane.f32.xlu0 %v1201
  %v1203 = vpop.xlane.xlu0 %1202
  %vm1204 = vcmask 7168
  %1205 = vst.msk [vmem:[%s6] sm:$0xff] %vm1204, %v1182
  %1206 = vst.msk [vmem:[%s6 + $0x8] sm:$0xff] %vm1204, %v1185
  %1207 = vst.msk [vmem:[%s6 + $0x10] sm:$0xff] %vm1204, %v1188
  %1208 = vst.msk [vmem:[%s6 + $0x18] sm:$0xff] %vm1204, %v1191
  %1209 = vst.msk [vmem:[%s6 + $0x20] sm:$0xff] %vm1204, %v1194
  %1210 = vst.msk [vmem:[%s6 + $0x28] sm:$0xff] %vm1204, %v1197
  %1211 = vst.msk [vmem:[%s6 + $0x30] sm:$0xff] %vm1204, %v1200
  %1212 = vst.msk [vmem:[%s6 + $0x38] sm:$0xff] %vm1204, %v1203
  // Predicated region
  $region26: #{parameter_property_predictor.1} parent=0 // pred_check
    _
  $region27: #{parameter_property_predictor.1} parent=0 // pred_check_branch
    %1214 = sbr.rel (0) target = $region29
  $region28: #{parameter_property_predictor.1} parent=0 // pred_region
    _
  $region29: #{parameter_property_predictor.1} parent=0 // pred_fallthru
    _
  // Predicated region
  $region30: #{parameter_property_predictor.1} parent=0 // pred_check
    _
  $region31: #{parameter_property_predictor.1} parent=0 // pred_check_branch
    %1216 = sbr.rel (0) target = $region33
  $region32: #{parameter_property_predictor.1} parent=0 // pred_region
    _
  $region33: #{parameter_property_predictor.1} parent=0 // pred_fallthru
    _

</llo_original>
